<compile_context>
chip_gen: v7x
topology: tpu7x:2x2x1
jax: 0.10.0
libtpu: 0.0.40
codegen_flags: <defaults>
</compile_context>

<pallas_src>
import functools

import jax
import jax.numpy as jnp
from jax.experimental import pallas as pl
from jax.experimental.pallas import tpu as pltpu


def _round_up(x: int, m: int) -> int:
    return ((x + m - 1) // m) * m


def _matrix_embedding_kernel(x_ref, w_ref, o_ref):
    # x_ref: (L, TB, Fp)  -- lags-major, batch on sublanes, factors on lanes
    # w_ref: (L, Fp)      -- (tiled) lag_factor parameter
    # o_ref: (TB, Fp)     -- lane-dense output block
    L = x_ref.shape[0]
    w = w_ref[...].astype(jnp.float32)                       # tiny (L, Fp)
    # Unrolled accumulate over lags: per-l loads, f32 accumulator, no big
    # (TB, L, Fp) intermediate and no cross-sublane reduce.
    acc = x_ref[0].astype(jnp.float32) * w[0:1, :]
    for l in range(1, L):
        acc = acc + x_ref[l].astype(jnp.float32) * w[l:l + 1, :]
    o_ref[...] = acc.astype(o_ref.dtype)


def _pick_batch_tile(bp: int, L: int, fp: int, itemsize: int,
                     vmem_budget_bytes: int) -> int:
    # Double-buffered input block (L*TB*Fp) + output block (TB*Fp); w is negligible.
    per_row_bytes = 2 * (L + 1) * fp * itemsize
    tb = vmem_budget_bytes // max(per_row_bytes, 1)
    tb = max(8, min(int(tb), 1024))          # 256-1024-ish rows is the sweet spot
    tb = (tb // 8) * 8                       # sublane multiple
    tb = min(tb, _round_up(bp, 8))           # never bigger than (padded) batch
    return tb


@functools.partial(jax.jit, static_argnames=("batch_tile", "vmem_budget_bytes"))
def matrix_embedding_forward(lags_vectors, lag_factor, *, batch_tile=None,
                             vmem_budget_bytes=8 * 1024 * 1024):
    """Pallas implementation of MatrixEmbedding.forward.

    lags_vectors: (B, L, F)
    lag_factor:   (L, F)
    returns:      (B, F)
    """
    B, L, F = lags_vectors.shape
    assert lag_factor.shape == (L, F)
    dtype = lags_vectors.dtype
    itemsize = jnp.dtype(dtype).itemsize

    # ---- Lane packing: pack G batch elements per row so the last dim is 128-wide.
    if F < 128 and 128 % F == 0:
        G = 128 // F
    else:
        G = 1
    B_g = _round_up(B, G)
    x = lags_vectors
    if B_g != B:
        x = jnp.pad(x, ((0, B_g - B), (0, 0), (0, 0)))
    Bp = B_g // G
    Fp = G * F

    # (B_g, L, F) -> (L, B_g, F) -> (L, Bp, Fp): lags-major, lane-dense rows.
    x_t = jnp.transpose(x, (1, 0, 2)).reshape(L, Bp, Fp)
    w_p = jnp.tile(lag_factor, (1, G)) if G > 1 else lag_factor      # (L, Fp)

    # ---- VMEM-aware batch tile + pad packed batch to a tile multiple.
    if batch_tile is None:
        tb = _pick_batch_tile(Bp, L, Fp, itemsize, vmem_budget_bytes)
    else:
        tb = min(int(batch_tile), _round_up(Bp, 8))
        tb = max(8, (tb // 8) * 8)
    Bp_pad = _round_up(Bp, tb)
    if Bp_pad != Bp:
        x_t = jnp.pad(x_t, ((0, 0), (0, Bp_pad - Bp), (0, 0)))

    grid = (Bp_pad // tb,)

    out_packed = pl.pallas_call(
        _matrix_embedding_kernel,
        out_shape=jax.ShapeDtypeStruct((Bp_pad, Fp), dtype),
        grid_spec=pltpu.PrefetchScalarGridSpec(
            num_scalar_prefetch=0,
            grid=grid,
            in_specs=[
                # x: tile over packed batch; lags and (packed) factors kept whole.
                pl.BlockSpec((L, tb, Fp), lambda i: (0, i, 0)),
                # lag_factor: same full block every grid step.
                pl.BlockSpec((L, Fp), lambda i: (0, 0)),
            ],
            out_specs=pl.BlockSpec((tb, Fp), lambda i: (i, 0)),
        ),
        compiler_params=pltpu.CompilerParams(
            dimension_semantics=("parallel",),        # megacore-shard batch axis
            vmem_limit_bytes=32 * 1024 * 1024,        # headroom on v5e's 16MiB default
        ),
    )(x_t, w_p)

    # Unpack: (Bp_pad, Fp) -> (B, F).
    out = out_packed[:Bp].reshape(B_g, F)[:B]
    return out


def _reference(lags_vectors, lag_factor):
    return jnp.sum(lags_vectors * lag_factor[None, :, :], axis=1)


if __name__ == "__main__":
    key = jax.random.PRNGKey(0)

    def make_case(key, batch, lags, factors):
        k_x, k_w = jax.random.split(key)
        w = jax.random.uniform(k_w, (lags, factors), dtype=jnp.float32)  # torch.rand-like
        x = jax.random.normal(k_x, (batch, lags, factors), dtype=jnp.float32)
        return x, w

    # Primary example consistent with the module: lag_set of length 5, factors=32.
    k0, k1, k2, k3 = jax.random.split(key, 4)
    x0, w0 = make_case(k0, batch=8, lags=5, factors=32)
    out0 = jax.block_until_ready(matrix_embedding_forward(x0, w0))
    assert out0.shape == (8, 32)
    assert jnp.allclose(out0, _reference(x0, w0), atol=1e-5, rtol=1e-5)

    # Multi-grid-step case (exercises pipelining / megacore path).
    x1, w1 = make_case(k1, batch=128, lags=5, factors=32)
    out1 = jax.block_until_ready(matrix_embedding_forward(x1, w1, batch_tile=8))
    assert jnp.allclose(out1, _reference(x1, w1), atol=1e-5, rtol=1e-5)

    # Non-divisible batch + F not a divisor of 128 (G=1 fallback + padding path).
    x2, w2 = make_case(k2, batch=37, lags=3, factors=24)
    out2 = jax.block_until_ready(matrix_embedding_forward(x2, w2))
    assert jnp.allclose(out2, _reference(x2, w2), atol=1e-5, rtol=1e-5)

    # Packed case with odd packed-batch size (G=2 + padding path).
    x3, w3 = make_case(k3, batch=50, lags=5, factors=64)
    out3 = jax.block_until_ready(matrix_embedding_forward(x3, w3))
    assert jnp.allclose(out3, _reference(x3, w3), atol=1e-5, rtol=1e-5)

    print("KERNEL_OK")
</pallas_src>

<mosaic_0001>
module attributes {stable_mosaic.version = 11 : i64} {
  func.func @_matrix_embedding_kernel(%arg0: i32, %arg1: memref<5x8x128xf32, #tpu.memory_space<vmem>>, %arg2: memref<5x128xf32, #tpu.memory_space<vmem>>, %arg3: memref<8x128xf32, #tpu.memory_space<vmem>>) attributes {dimension_semantics = [#tpu.dimension_semantics<parallel>], iteration_bounds = array<i64: 1>, scalar_prefetch = 0 : i64, scratch_operands = 0 : i64, tpu.core_type = #tpu.core_type<tc>, window_params = [{transform_indices = @transform_0, window_bounds = array<i64: 5, 8, 128>}, {pipeline_mode = #tpu.pipeline_mode<synchronous>, transform_indices = @transform_1, window_bounds = array<i64: 5, 128>}, {transform_indices = @transform_2, window_bounds = array<i64: 8, 128>}]} {
    %c0 = arith.constant 0 : index
    %c0_0 = arith.constant 0 : index
    %0 = vector.load %arg2[%c0, %c0_0] : memref<5x128xf32, #tpu.memory_space<vmem>>, vector<5x128xf32>
    %c0_1 = arith.constant 0 : index
    %c0_2 = arith.constant 0 : index
    %c0_3 = arith.constant 0 : index
    %1 = vector.load %arg1[%c0_1, %c0_2, %c0_3] : memref<5x8x128xf32, #tpu.memory_space<vmem>>, vector<1x8x128xf32>
    %2 = vector.shape_cast %1 : vector<1x8x128xf32> to vector<8x128xf32>
    %3 = vector.extract_strided_slice %0 {offsets = [0, 0], sizes = [1, 128], strides = [1, 1]} : vector<5x128xf32> to vector<1x128xf32>
    %4 = vector.broadcast %3 : vector<1x128xf32> to vector<8x128xf32>
    %5 = arith.mulf %2, %4 : vector<8x128xf32>
    %c1 = arith.constant 1 : index
    %c0_4 = arith.constant 0 : index
    %c0_5 = arith.constant 0 : index
    %6 = vector.load %arg1[%c1, %c0_4, %c0_5] : memref<5x8x128xf32, #tpu.memory_space<vmem>>, vector<1x8x128xf32>
    %7 = vector.shape_cast %6 : vector<1x8x128xf32> to vector<8x128xf32>
    %8 = vector.extract_strided_slice %0 {offsets = [1, 0], sizes = [1, 128], strides = [1, 1]} : vector<5x128xf32> to vector<1x128xf32>
    %9 = vector.broadcast %8 : vector<1x128xf32> to vector<8x128xf32>
    %10 = arith.mulf %7, %9 : vector<8x128xf32>
    %11 = arith.addf %5, %10 : vector<8x128xf32>
    %c2 = arith.constant 2 : index
    %c0_6 = arith.constant 0 : index
    %c0_7 = arith.constant 0 : index
    %12 = vector.load %arg1[%c2, %c0_6, %c0_7] : memref<5x8x128xf32, #tpu.memory_space<vmem>>, vector<1x8x128xf32>
    %13 = vector.shape_cast %12 : vector<1x8x128xf32> to vector<8x128xf32>
    %14 = vector.extract_strided_slice %0 {offsets = [2, 0], sizes = [1, 128], strides = [1, 1]} : vector<5x128xf32> to vector<1x128xf32>
    %15 = vector.broadcast %14 : vector<1x128xf32> to vector<8x128xf32>
    %16 = arith.mulf %13, %15 : vector<8x128xf32>
    %17 = arith.addf %11, %16 : vector<8x128xf32>
    %c3 = arith.constant 3 : index
    %c0_8 = arith.constant 0 : index
    %c0_9 = arith.constant 0 : index
    %18 = vector.load %arg1[%c3, %c0_8, %c0_9] : memref<5x8x128xf32, #tpu.memory_space<vmem>>, vector<1x8x128xf32>
    %19 = vector.shape_cast %18 : vector<1x8x128xf32> to vector<8x128xf32>
    %20 = vector.extract_strided_slice %0 {offsets = [3, 0], sizes = [1, 128], strides = [1, 1]} : vector<5x128xf32> to vector<1x128xf32>
    %21 = vector.broadcast %20 : vector<1x128xf32> to vector<8x128xf32>
    %22 = arith.mulf %19, %21 : vector<8x128xf32>
    %23 = arith.addf %17, %22 : vector<8x128xf32>
    %c4 = arith.constant 4 : index
    %c0_10 = arith.constant 0 : index
    %c0_11 = arith.constant 0 : index
    %24 = vector.load %arg1[%c4, %c0_10, %c0_11] : memref<5x8x128xf32, #tpu.memory_space<vmem>>, vector<1x8x128xf32>
    %25 = vector.shape_cast %24 : vector<1x8x128xf32> to vector<8x128xf32>
    %26 = vector.extract_strided_slice %0 {offsets = [4, 0], sizes = [1, 128], strides = [1, 1]} : vector<5x128xf32> to vector<1x128xf32>
    %27 = vector.broadcast %26 : vector<1x128xf32> to vector<8x128xf32>
    %28 = arith.mulf %25, %27 : vector<8x128xf32>
    %29 = arith.addf %23, %28 : vector<8x128xf32>
    %c0_12 = arith.constant 0 : index
    %c0_13 = arith.constant 0 : index
    %30 = vector.load %arg3[%c0_12, %c0_13] : memref<8x128xf32, #tpu.memory_space<vmem>>, vector<8x128xf32>
    tpu.vector_store %arg3[%c0_12, %c0_13], %29 {strides = array<i32>} : memref<8x128xf32, #tpu.memory_space<vmem>>, vector<8x128xf32>,
    return
  }
  func.func @transform_0(%arg0: i32) -> (i32, i32, i32) {
    %c0_i32 = arith.constant 0 : i32
    %c0_i32_0 = arith.constant 0 : i32
    %c0_i32_1 = arith.constant 0 : i32
    return %c0_i32, %arg0, %c0_i32_0 : i32, i32, i32
  }
  func.func @transform_1(%arg0: i32) -> (i32, i32) {
    %c0_i32 = arith.constant 0 : i32
    %c0_i32_0 = arith.constant 0 : i32
    %c0_i32_1 = arith.constant 0 : i32
    return %c0_i32, %c0_i32_0 : i32, i32
  }
  func.func @transform_2(%arg0: i32) -> (i32, i32) {
    %c0_i32 = arith.constant 0 : i32
    %c0_i32_0 = arith.constant 0 : i32
    return %arg0, %c0_i32 : i32, i32
  }
}

</mosaic_0001>

<llo_original>
// kernel: tile.9
$region0: #{tile.9}
  %s0 = inlined_call_operand.vmem [shape: f32[5,4,32], index: 0, kind: input, shape index: {}]
  %s1 = inlined_call_operand.vmem [shape: f32[5,128], index: 1, kind: output, shape index: {}]
  $region1: #{tile.9} parent=0
    #allocation0 [shape = 'u8[20480]{0}', space=vmem, size = 0x5000, scoped, tag = 'scoped mem for input reshape']
    %s3 = sshllo.u32 0, 4
    %s4 = smul.addr 4, 4
    %s5 = scalar_lea.vmem %s0, %s4
    %v6 = vld [vmem:[%s5] sm:%s3]
    %s7 = scalar_lea.vmem [#allocation0], 32
    %8 = vst [vmem:[%s7] sm:%s3] %v6
    %s9 = smul.addr 4, 3
    %s10 = scalar_lea.vmem %s0, %s9
    %v11 = vld [vmem:[%s10] sm:%s3]
    %s12 = scalar_lea.vmem [#allocation0], 24
    %13 = vst [vmem:[%s12] sm:%s3] %v11
    %s14 = smul.addr 4, 2
    %s15 = scalar_lea.vmem %s0, %s14
    %v16 = vld [vmem:[%s15] sm:%s3]
    %s17 = scalar_lea.vmem [#allocation0], 16
    %18 = vst [vmem:[%s17] sm:%s3] %v16
    %s19 = scalar_lea.vmem %s0, 4
    %v20 = vld [vmem:[%s19] sm:%s3]
    %s21 = scalar_lea.vmem [#allocation0], 8
    %22 = vst [vmem:[%s21] sm:%s3] %v20
    %v23 = vld [vmem:[%s0] sm:%s3]
    %24 = vst [vmem:[#allocation0] sm:%s3] %v23
    %v25 = vld [vmem:[#allocation0] ss:$8 sm:$0xf]
    %s26 = scalar_lea.vmem [#allocation0], 28
    %v27 = vld [vmem:[%s26] sm:$0x10]
    %vm28 = vcmask 1044484
    %v29 = vsel %vm28, %v27, %v25
    %vm30 = vcmask 261120
    %31 = vst.msk [vmem:[%s1] sm:$0x1f] %vm30, %v29
    %s32 = scalar_lea.vmem [#allocation0], 3
    %v33 = vld [vmem:[%s32] ss:$8 sm:$0xf]
    %s34 = scalar_lea.vmem [#allocation0], 31
    %v35 = vld [vmem:[%s34] sm:$0x10]
    %vm36 = vcmask 1044484
    %v37 = vsel %vm36, %v35, %v33
    %38 = vrot.lane.b32.xlu0 %v37, 96
    %v39 = vpop.permute.xlu0 %38
    %vm40 = vcmask 1048320
    %41 = vst.msk [vmem:[%s1] sm:$0x1f] %vm40, %v39
    %s42 = scalar_lea.vmem [#allocation0], 2
    %v43 = vld [vmem:[%s42] ss:$8 sm:$0xf]
    %s44 = scalar_lea.vmem [#allocation0], 30
    %v45 = vld [vmem:[%s44] sm:$0x10]
    %vm46 = vcmask 1044484
    %v47 = vsel %vm46, %v45, %v43
    %48 = vrot.lane.b32.xlu0 %v47, 64
    %v49 = vpop.permute.xlu0 %48
    %vm50 = vcmask 785920
    %51 = vst.msk [vmem:[%s1] sm:$0x1f] %vm50, %v49
    %s52 = scalar_lea.vmem [#allocation0], 1
    %v53 = vld [vmem:[%s52] ss:$8 sm:$0xf]
    %s54 = scalar_lea.vmem [#allocation0], 29
    %v55 = vld [vmem:[%s54] sm:$0x10]
    %vm56 = vcmask 1044484
    %v57 = vsel %vm56, %v55, %v53
    %58 = vrot.lane.b32.xlu0 %v57, 32
    %v59 = vpop.permute.xlu0 %58
    %vm60 = vcmask 523520
    %61 = vst.msk [vmem:[%s1] sm:$0x1f] %vm60, %v59

// kernel: matrix_embedding_forward.1
$region0: #{matrix_embedding_forward.1}
  #allocation0 [shape = 'u32[]', space=smem, size = 0x4, offset = 0x4, fixed_abs, tag = 'smem constant byte address 0x4 - core index']
  #allocation1 [shape = 'u32[144,128]{1,0:T(1,128)}', space=vmem, size = 0x12000, scoped, tag = 'internal scratch']
  %s0 = inlined_call_operand.vmem [shape: f32[5,8,128], index: 0, kind: input, shape index: {}]
  %s1 = inlined_call_operand.vmem [shape: f32[5,128], index: 1, kind: input, shape index: {}]
  %s2 = inlined_call_operand.vmem [shape: f32[8,128], index: 2, kind: output, shape index: {}]
  %s3 = sld [smem:[#allocation0]]
  $region18: #{matrix_embedding_forward.1} parent=0
    _
  %s5 = ssub.s32 1, %s3
  %s6 = scalar_select 0, %s5, %s3
  // Predicated region
  $region2: #{matrix_embedding_forward.1} parent=0 // pred_check
    _
  $region3: #{matrix_embedding_forward.1} parent=0 // pred_check_branch
    %8 = sbr.rel (0) target = $region5
  $region4: #{matrix_embedding_forward.1} parent=0 // pred_region
    _
  $region5: #{matrix_embedding_forward.1} parent=0 // pred_fallthru
    _
  // Predicated region
  $region6: #{matrix_embedding_forward.1} parent=0 // pred_check
    _
  $region7: #{matrix_embedding_forward.1} parent=0 // pred_check_branch
    %10 = sbr.rel (0) target = $region9
  $region8: #{matrix_embedding_forward.1} parent=0 // pred_region
    _
  $region9: #{matrix_embedding_forward.1} parent=0 // pred_fallthru
    _
  %v11 = vld [vmem:[%s1] sm:$0x1f]
  %v12 = vld [vmem:[%s0] sm:$0xff]
  %v13 = vlaneseq
  %v14 = vshrl.u32 %v13, 7
  %v15 = vsub.s32 0, %v14
  %v16 = vrot.slane %v11, %v15
  %v17 = vmul.f32 %v12, %v16
  %s18 = scalar_lea.vmem %s0, 8
  %v19 = vld [vmem:[%s18] sm:$0xff]
  %v20 = vlaneseq
  %v21 = vshrl.u32 %v20, 7
  %v22 = vsub.s32 1, %v21
  %v23 = vrot.slane %v11, %v22
  %v24 = vmul.f32 %v19, %v23
  %v25 = vadd.f32 %v17, %v24
  %s26 = scalar_lea.vmem %s0, 16
  %v27 = vld [vmem:[%s26] sm:$0xff]
  %v28 = vlaneseq
  %v29 = vshrl.u32 %v28, 7
  %v30 = vsub.s32 2, %v29
  %v31 = vrot.slane %v11, %v30
  %v32 = vmul.f32 %v27, %v31
  %v33 = vadd.f32 %v25, %v32
  %s34 = scalar_lea.vmem %s0, 24
  %v35 = vld [vmem:[%s34] sm:$0xff]
  %v36 = vlaneseq
  %v37 = vshrl.u32 %v36, 7
  %v38 = vsub.s32 3, %v37
  %v39 = vrot.slane %v11, %v38
  %v40 = vmul.f32 %v35, %v39
  %v41 = vadd.f32 %v33, %v40
  %s42 = scalar_lea.vmem %s0, 32
  %v43 = vld [vmem:[%s42] sm:$0xff]
  %v44 = vlaneseq
  %v45 = vshrl.u32 %v44, 7
  %v46 = vsub.s32 4, %v45
  %v47 = vrot.slane %v11, %v46
  %v48 = vmul.f32 %v43, %v47
  %v49 = vadd.f32 %v41, %v48
  %50 = vst [vmem:[%s2] sm:$0xff] %v49
  // Predicated region
  $region10: #{matrix_embedding_forward.1} parent=0 // pred_check
    _
  $region11: #{matrix_embedding_forward.1} parent=0 // pred_check_branch
    %52 = sbr.rel (0) target = $region13
  $region12: #{matrix_embedding_forward.1} parent=0 // pred_region
    _
  $region13: #{matrix_embedding_forward.1} parent=0 // pred_fallthru
    _
  // Predicated region
  $region14: #{matrix_embedding_forward.1} parent=0 // pred_check
    _
  $region15: #{matrix_embedding_forward.1} parent=0 // pred_check_branch
    %54 = sbr.rel (0) target = $region17
  $region16: #{matrix_embedding_forward.1} parent=0 // pred_region
    _
  $region17: #{matrix_embedding_forward.1} parent=0 // pred_fallthru
    _

</llo_original>
